<compile_context>
chip_gen: v7x
topology: tpu7x:2x2x1
jax: 0.10.0
libtpu: 0.0.40
codegen_flags: <defaults>
</compile_context>

<pallas_src>
import functools

import jax
import jax.numpy as jnp
from jax.experimental import pallas as pl
from jax.experimental.pallas import tpu as pltpu

_EPS = 1e-8
# ~86% of HBM roofline in measured tile sweeps; bigger tiles mostly shorten the
# grid (bad for sharding across v7x's two TensorCores) without more bandwidth.
_MAX_TILE_M = 1024


def _round_up(a, b):
    return -(-a // b) * b


def _vmem_capacity_bytes():
    try:
        return int(pltpu.get_tpu_info().vmem_capacity_bytes)
    except Exception:
        return 64 << 20  # conservative (v7x-sized) assumption


def _cosine_sim_kernel(x_ref, y_ref, o_ref, *, inv_temp):
    # x_ref, y_ref: (tile_m, H) blocks in VMEM; o_ref: (tile_m, 1).
    x = x_ref[...].astype(jnp.float32)
    y = y_ref[...].astype(jnp.float32)

    dot = jnp.sum(x * y, axis=-1, keepdims=True)   # (tile_m, 1)
    sxx = jnp.sum(x * x, axis=-1, keepdims=True)   # (tile_m, 1)
    syy = jnp.sum(y * y, axis=-1, keepdims=True)   # (tile_m, 1)

    # Match the reference exactly: sqrt before multiply, then eps clamp.
    # (sqrt-first avoids f32 overflow of sxx*syy for extreme inputs; all of
    # this operates on (tile_m, 1) data so it is negligible vs the HBM reads.)
    norm = jnp.sqrt(sxx) * jnp.sqrt(syy)
    inv_norm = 1.0 / jnp.maximum(norm, _EPS)
    o_ref[...] = (dot * inv_norm * inv_temp).astype(o_ref.dtype)


def _pick_tile_m(M, H, itemsize, packing, input_budget, tile_m):
    """Pick a sublane-packed tile_m that fits the VMEM budget and keeps the
    grid balanced across (up to 2) TensorCores."""
    if tile_m is not None:
        tm = max(packing, (int(tile_m) // packing) * packing)
        return min(tm, _round_up(M, packing))

    # 2 inputs x 2 pipeline buffers; minor dim is lane-padded to 128 in VMEM.
    h_lanes = _round_up(max(H, 1), 128)
    bytes_per_row = 2 * 2 * h_lanes * itemsize
    tm = max(packing, min(_MAX_TILE_M, input_budget // bytes_per_row))
    tm = (tm // packing) * packing
    tm = min(tm, _round_up(M, packing))   # don't exceed the data

    # v7x megacore balance: dimension_semantics=("parallel",) only helps if
    # there are >= 2 blocks to shard. Aim for >= 4 equal-ish blocks when the
    # data allows, and prefer an even block count so the ragged last block
    # doesn't leave one core idle. Harmless on single-TC v5e/v6e.
    max_blocks = pl.cdiv(M, packing)
    target_blocks = min(4, max_blocks)
    if pl.cdiv(M, tm) < target_blocks:
        tm = max(packing, _round_up(pl.cdiv(M, target_blocks), packing))
    grid = pl.cdiv(M, tm)
    if grid > 1 and grid % 2 == 1:
        tm_even = max(packing, _round_up(pl.cdiv(M, grid + 1), packing))
        if pl.cdiv(M, tm_even) % 2 == 0:
            tm = tm_even
    return tm


def similarity(x, y, temp, *, tile_m=None):
    """Cosine similarity along the last axis, divided by temp (Pallas TPU).

    x, y: arrays of identical shape [..., H]. Returns x.shape[:-1], float32.
    """
    assert x.shape == y.shape, "this kernel assumes x and y share a shape"
    lead_shape = x.shape[:-1]
    H = int(x.shape[-1])
    M = 1
    for d in lead_shape:
        M *= int(d)

    # Contiguous reshapes: no extra HBM traffic.
    x2 = x.reshape(M, H)
    y2 = y.reshape(M, H)

    x_item = jnp.dtype(x.dtype).itemsize
    y_item = jnp.dtype(y.dtype).itemsize
    max_item = max(x_item, y_item)
    min_item = min(x_item, y_item)
    # Sublane packing factor of the narrowest input dtype (8 f32 / 16 bf16 /
    # 32 int8); the wider dtype's factor always divides it.
    packing = 8 * max(1, 4 // min_item)

    # Generation-aware input budget: ~16 MiB of double-buffered inputs on
    # 128 MiB-VMEM parts (v5e/v6e), ~8 MiB on 64 MiB parts (v7x).
    vmem_cap = _vmem_capacity_bytes()
    input_budget = (16 << 20) if vmem_cap >= (100 << 20) else (8 << 20)

    tm = _pick_tile_m(M, H, max_item, packing, input_budget, tile_m)
    # No input padding: the final partial block may read rows past M; they are
    # per-row garbage (no cross-row mixing in this kernel) and are dropped by
    # the output slice below.
    grid = pl.cdiv(M, tm)

    # vmem_limit derived from the actual buffer footprint (+ headroom for XLA
    # fusions), never sailing close to v7x's 64 MiB physical VMEM.
    h_lanes = _round_up(max(H, 1), 128)
    in_bytes = 2 * tm * h_lanes * (x_item + y_item)   # 2 pipeline buffers each
    out_bytes = 2 * tm * 128 * 4                      # (tm,1) lane-padded, 2 bufs
    needed = in_bytes + out_bytes
    vmem_cap_limit = (100 << 20) if vmem_cap >= (100 << 20) else (56 << 20)
    vmem_limit = min(max(needed + (8 << 20), 24 << 20), vmem_cap_limit)

    kernel = functools.partial(_cosine_sim_kernel,
                               inv_temp=float(1.0 / float(temp)))

    out = pl.pallas_call(
        kernel,
        out_shape=jax.ShapeDtypeStruct((grid * tm, 1), jnp.float32),
        grid_spec=pltpu.PrefetchScalarGridSpec(
            num_scalar_prefetch=0,
            grid=(grid,),
            in_specs=[
                pl.BlockSpec((tm, H), lambda i: (i, 0)),
                pl.BlockSpec((tm, H), lambda i: (i, 0)),
            ],
            out_specs=pl.BlockSpec((tm, 1), lambda i: (i, 0)),
        ),
        compiler_params=pltpu.CompilerParams(
            # Rows are independent -> shard the grid across TensorCores (v7x).
            dimension_semantics=("parallel",),
            vmem_limit_bytes=int(vmem_limit),
        ),
    )(x2, y2)

    return out[:M, 0].reshape(lead_shape)


def _reference(x, y, temp):
    xf = x.astype(jnp.float32)
    yf = y.astype(jnp.float32)
    dot = jnp.sum(xf * yf, axis=-1)
    nx = jnp.linalg.norm(xf, axis=-1)
    ny = jnp.linalg.norm(yf, axis=-1)
    return dot / jnp.maximum(nx * ny, _EPS) / temp


if __name__ == "__main__":
    key = jax.random.PRNGKey(0)
    k1, k2, k3, k4, k5, k6 = jax.random.split(key, 6)

    # Small shapes consistent with the module: (batch, seq, hidden).
    B, N, H = 2, 8, 32
    temp = 0.05  # typical SimCSE temperature

    x = jax.random.normal(k1, (B, N, H), dtype=jnp.float32)
    y = jax.random.normal(k2, (B, N, H), dtype=jnp.float32)

    out = jax.block_until_ready(similarity(x, y, temp))
    ref = _reference(x, y, temp)
    assert out.shape == (B, N)
    assert jnp.allclose(out, ref, atol=1e-5, rtol=1e-5)

    # Multi-step grid with a ragged final block (no input padding).
    xb = jax.random.normal(k3, (3, 37, H), dtype=jnp.float32)
    yb = jax.random.normal(k4, (3, 37, H), dtype=jnp.float32)
    outb = jax.block_until_ready(similarity(xb, yb, temp, tile_m=16))
    refb = _reference(xb, yb, temp)
    assert outb.shape == (3, 37)
    assert jnp.allclose(outb, refb, atol=1e-5, rtol=1e-5)

    # bf16 path: exercises the 16-row sublane packing + auto tile selection.
    xc = jax.random.normal(k5, (2, 32, H), dtype=jnp.bfloat16)
    yc = jax.random.normal(k6, (2, 32, H), dtype=jnp.bfloat16)
    outc = jax.block_until_ready(similarity(xc, yc, temp))
    refc = _reference(xc, yc, temp)
    assert outc.shape == (2, 32)
    assert jnp.allclose(outc, refc, atol=1e-3, rtol=1e-3)

    print("KERNEL_OK")
</pallas_src>

<mosaic_0001>
module attributes {stable_mosaic.version = 11 : i64} {
  func.func @_cosine_sim_kernel(%arg0: i32, %arg1: memref<8x32xf32, #tpu.memory_space<vmem>>, %arg2: memref<8x32xf32, #tpu.memory_space<vmem>>, %arg3: memref<8x1xf32, #tpu.memory_space<vmem>>) attributes {dimension_semantics = [#tpu.dimension_semantics<parallel>], iteration_bounds = array<i64: 2>, scalar_prefetch = 0 : i64, scratch_operands = 0 : i64, tpu.core_type = #tpu.core_type<tc>, window_params = [{transform_indices = @transform_0, window_bounds = array<i64: 8, 32>}, {transform_indices = @transform_1, window_bounds = array<i64: 8, 32>}, {transform_indices = @transform_2, window_bounds = array<i64: 8, 1>}]} {
    %c0 = arith.constant 0 : index
    %c0_0 = arith.constant 0 : index
    %0 = vector.load %arg1[%c0, %c0_0] : memref<8x32xf32, #tpu.memory_space<vmem>>, vector<8x32xf32>
    %c0_1 = arith.constant 0 : index
    %c0_2 = arith.constant 0 : index
    %1 = vector.load %arg2[%c0_1, %c0_2] : memref<8x32xf32, #tpu.memory_space<vmem>>, vector<8x32xf32>
    %2 = arith.mulf %0, %1 : vector<8x32xf32>
    %cst = arith.constant dense<0.000000e+00> : vector<8xf32>
    %3 = vector.multi_reduction <add>, %2, %cst [1] : vector<8x32xf32> to vector<8xf32>
    %4 = vector.shape_cast %3 : vector<8xf32> to vector<8x1xf32>
    %5 = arith.mulf %0, %0 : vector<8x32xf32>
    %cst_3 = arith.constant dense<0.000000e+00> : vector<8xf32>
    %6 = vector.multi_reduction <add>, %5, %cst_3 [1] : vector<8x32xf32> to vector<8xf32>
    %7 = vector.shape_cast %6 : vector<8xf32> to vector<8x1xf32>
    %8 = arith.mulf %1, %1 : vector<8x32xf32>
    %cst_4 = arith.constant dense<0.000000e+00> : vector<8xf32>
    %9 = vector.multi_reduction <add>, %8, %cst_4 [1] : vector<8x32xf32> to vector<8xf32>
    %10 = vector.shape_cast %9 : vector<8xf32> to vector<8x1xf32>
    %11 = math.sqrt %7 : vector<8x1xf32>
    %12 = math.sqrt %10 : vector<8x1xf32>
    %13 = arith.mulf %11, %12 : vector<8x1xf32>
    %cst_5 = arith.constant 9.99999993E-9 : f32
    %14 = vector.broadcast %cst_5 : f32 to vector<8x1xf32>
    %15 = arith.maximumf %13, %14 : vector<8x1xf32>
    %cst_6 = arith.constant 1.000000e+00 : f32
    %16 = vector.broadcast %cst_6 : f32 to vector<8x1xf32>
    %17 = arith.divf %16, %15 : vector<8x1xf32>
    %18 = arith.mulf %4, %17 : vector<8x1xf32>
    %cst_7 = arith.constant 2.000000e+01 : f32
    %19 = vector.broadcast %cst_7 : f32 to vector<8x1xf32>
    %20 = arith.mulf %18, %19 : vector<8x1xf32>
    %c0_8 = arith.constant 0 : index
    %c0_9 = arith.constant 0 : index
    %21 = vector.load %arg3[%c0_8, %c0_9] : memref<8x1xf32, #tpu.memory_space<vmem>>, vector<8x1xf32>
    tpu.vector_store %arg3[%c0_8, %c0_9], %20 {strides = array<i32>} : memref<8x1xf32, #tpu.memory_space<vmem>>, vector<8x1xf32>,
    return
  }
  func.func @transform_0(%arg0: i32) -> (i32, i32) {
    %c0_i32 = arith.constant 0 : i32
    %c0_i32_0 = arith.constant 0 : i32
    return %arg0, %c0_i32 : i32, i32
  }
  func.func @transform_1(%arg0: i32) -> (i32, i32) {
    %c0_i32 = arith.constant 0 : i32
    %c0_i32_0 = arith.constant 0 : i32
    return %arg0, %c0_i32 : i32, i32
  }
  func.func @transform_2(%arg0: i32) -> (i32, i32) {
    %c0_i32 = arith.constant 0 : i32
    %c0_i32_0 = arith.constant 0 : i32
    return %arg0, %c0_i32 : i32, i32
  }
}

</mosaic_0001>

<llo_original>
// kernel: tpu_custom_call.1
$region0: #{tpu_custom_call.1}
  #allocation0 [shape = 'u32[]', space=smem, size = 0x4, offset = 0x4, fixed_abs, tag = 'smem constant byte address 0x4 - core index']
  #allocation1 [shape = 'u32[144,128]{1,0:T(1,128)}', space=vmem, size = 0x12000, scoped, tag = 'internal scratch']
  %s0 = inlined_call_operand.hbm [shape: f32[16,32], index: 0, kind: input, shape index: {}]
  %s1 = inlined_call_operand.hbm [shape: f32[16,32], index: 1, kind: input, shape index: {}]
  %s2 = inlined_call_operand.vmem [shape: f32[16,1], index: 2, kind: output, shape index: {}]
  %s3 = sld [smem:[#allocation0]]
  $region49: #{tpu_custom_call.1} parent=0
    _
  %s5 = ssub.s32 1, %s3
  %s6 = scalar_select 0, %s5, %s3
  $region1: #{tpu_custom_call.1} parent=0
    #allocation2 [shape = 'u8[8192]{0}', space=vmem, size = 0x2000, scoped, tag = 'input window, operand 0']
    #allocation3 [shape = 's32[2]{0}', space=sflag, size = 0x8, scoped, tag = 'scoped memory for tpu_custom_call.1']
    #allocation4 [shape = 'u8[8192]{0}', space=vmem, size = 0x2000, scoped, tag = 'input window, operand 1']
    #allocation5 [shape = 's32[2]{0}', space=sflag, size = 0x8, scoped, tag = 'scoped memory for tpu_custom_call.1']
    %7 = vsyncpa [#allocation3], 0
    %s8 = scalar_lea.sflag [#allocation3], 1
    %9 = vsyncpa %s8, 0
    %10 = vsyncpa [#allocation5], 0
    %s11 = scalar_lea.sflag [#allocation5], 1
    %12 = vsyncpa %s11, 0
    loop: start=0, step=1, limit=4
    $region2: #{tpu_custom_call.1} parent=1 // loop_pre_header
      _
    $region3: #{tpu_custom_call.1} parent=1 // loop_header
      %s14 = sphi 0, %s18
      %p15 = scmp.ge.s32.totalorder %s14, 4
      %s24 = sphi 0, %s26
      %s27 = sphi 0, %s24
      %s28 = sphi 0, %s27
      %s44 = sphi 0, %s28
      %s50 = sphi 0, %s52
      %s53 = sphi 0, %s50
      %s54 = sphi 0, %s53
      %s70 = sphi 0, %s54
      %s76 = sphi 0, %s78
      %s79 = sphi 0, %s76
      %s80 = sphi 0, %s79
      %s96 = sphi 0, %s80
    $region4: #{tpu_custom_call.1} parent=1 // loop_header_branch
      %17 = sbr.rel (%p15) target = $region8
    $region5: #{tpu_custom_call.1} parent=1 // loop_body
      %s19 = ssub.s32 %s14, 1
      %s20 = ssub.s32 %s14, 2
      %s21 = sadd.s32 %s14, 1
      %s22 = ssub.s32 %s14, %s21
      %p23 = scmp.eq.s32.totalorder %s22, 0
      %s25 = sadd.s32 %s24, 1
      %s26 = scalar_select %p23, %s24, %s25
      %p29 = pneg %p23
      %p30 = scmp.eq.s32.totalorder %s14, 1
      %p31 = por %p29, %p30
      %p32 = scmp.ne.s32.totalorder %s24, %s27
      %p33 = scmp.eq.s32.totalorder %s14, 0
      %p34 = por %p32, %p33
      %p35 = scmp.ne.s32.totalorder %s24, %s27
      %p36 = scmp.eq.s32.totalorder %s19, 1
      %p37 = por %p35, %p36
      %p38 = scmp.ne.s32.totalorder %s27, %s28
      %p39 = scmp.eq.s32.totalorder %s19, 0
      %p40 = por %p38, %p39
      %p41 = scmp.ne.s32.totalorder %s27, %s28
      %p42 = scmp.eq.s32.totalorder %s20, 1
      %p43 = por %p41, %p42
      %p45 = scmp.ne.s32.totalorder %s28, %s44
      %p46 = scmp.eq.s32.totalorder %s20, 0
      %p47 = por %p45, %p46
      %s48 = ssub.s32 %s14, %s21
      %p49 = scmp.eq.s32.totalorder %s48, 0
      %s51 = sadd.s32 %s50, 1
      %s52 = scalar_select %p49, %s50, %s51
      %p55 = pneg %p49
      %p56 = scmp.eq.s32.totalorder %s14, 1
      %p57 = por %p55, %p56
      %p58 = scmp.ne.s32.totalorder %s50, %s53
      %p59 = scmp.eq.s32.totalorder %s14, 0
      %p60 = por %p58, %p59
      %p61 = scmp.ne.s32.totalorder %s50, %s53
      %p62 = scmp.eq.s32.totalorder %s19, 1
      %p63 = por %p61, %p62
      %p64 = scmp.ne.s32.totalorder %s53, %s54
      %p65 = scmp.eq.s32.totalorder %s19, 0
      %p66 = por %p64, %p65
      %p67 = scmp.ne.s32.totalorder %s53, %s54
      %p68 = scmp.eq.s32.totalorder %s20, 1
      %p69 = por %p67, %p68
      %p71 = scmp.ne.s32.totalorder %s54, %s70
      %p72 = scmp.eq.s32.totalorder %s20, 0
      %p73 = por %p71, %p72
      %s74 = ssub.s32 %s14, %s21
      %p75 = scmp.eq.s32.totalorder %s74, 0
      %s77 = sadd.s32 %s76, 1
      %s78 = scalar_select %p75, %s76, %s77
      %p81 = pneg %p75
      %p82 = scmp.eq.s32.totalorder %s14, 1
      %p83 = por %p81, %p82
      %p84 = scmp.ne.s32.totalorder %s76, %s79
      %p85 = scmp.eq.s32.totalorder %s14, 0
      %p86 = por %p84, %p85
      %p87 = scmp.ne.s32.totalorder %s76, %s79
      %p88 = scmp.eq.s32.totalorder %s19, 1
      %p89 = por %p87, %p88
      %p90 = scmp.ne.s32.totalorder %s79, %s80
      %p91 = scmp.eq.s32.totalorder %s19, 0
      %p92 = por %p90, %p91
      %p93 = scmp.ne.s32.totalorder %s79, %s80
      %p94 = scmp.eq.s32.totalorder %s20, 1
      %p95 = por %p93, %p94
      %p97 = scmp.ne.s32.totalorder %s80, %s96
      %p98 = scmp.eq.s32.totalorder %s20, 0
      %p99 = por %p97, %p98
      %p100 = scmp.le.s32.totalorder 1, %s14
      %p101 = scmp.lt.s32.totalorder %s14, 3
      %p102 = pnand %p100, %p101
      %p103 = pneg %p102
      // Predicated region
      $region9: #{tpu_custom_call.1} parent=5 // pred_check
        _
      $region10: #{tpu_custom_call.1} parent=5 // pred_check_branch
        %105 = sbr.rel (%p102) target = $region12
      $region11: #{tpu_custom_call.1} parent=5 // pred_region
        %s106 = ssub.s32 %s14, 1
      $region12: #{tpu_custom_call.1} parent=5 // pred_fallthru
        _
      %p107 = scmp.lt.s32.totalorder %s14, 2
      // Predicated region
      $region13: #{tpu_custom_call.1} parent=5 // pred_check
        %p108 = pneg %p107
      $region14: #{tpu_custom_call.1} parent=5 // pred_check_branch
        %110 = sbr.rel (%p108) target = $region16
      $region15: #{tpu_custom_call.1} parent=5 // pred_region
        // Predicated region
        $region17: #{tpu_custom_call.1} parent=15 // pred_check
          %p111 = pneg %p34
        $region18: #{tpu_custom_call.1} parent=15 // pred_check_branch
          %113 = sbr.rel (%p111) target = $region20
        $region19: #{tpu_custom_call.1} parent=15 // pred_region
          %s114 = sand.u32 %s24, 1
          %s115 = scalar_lea.sflag [#allocation3], %s114
          %s116 = sand.u32 %s24, 1
          %s117 = smul.addr %s116, 8
          %s118 = scalar_lea.vmem [#allocation2], %s117
          %s120 = ssub.s32 128, 128
          %121 = vsyncadd %s115, %s120
          %s122 = smul.addr %s14, 128
          %s123 = scalar_lea.hbm %s0, %s122
          %s125 = sshll.u32 %s118, 4
          %s126 = int_to_ptr.vmem [resolvable:$true] %s125
          %128 = dma.hbm_to_vmem [thread:$0]  %s123, 128, %s126, %s115
        $region20: #{tpu_custom_call.1} parent=15 // pred_fallthru
          _
        // Predicated region
        $region21: #{tpu_custom_call.1} parent=15 // pred_check
          %p129 = pneg %p60
        $region22: #{tpu_custom_call.1} parent=15 // pred_check_branch
          %131 = sbr.rel (%p129) target = $region24
        $region23: #{tpu_custom_call.1} parent=15 // pred_region
          %s132 = sand.u32 %s50, 1
          %s133 = scalar_lea.sflag [#allocation5], %s132
          %s134 = sand.u32 %s50, 1
          %s135 = smul.addr %s134, 8
          %s136 = scalar_lea.vmem [#allocation4], %s135
          %s138 = ssub.s32 128, 128
          %139 = vsyncadd %s133, %s138
          %s140 = smul.addr %s14, 128
          %s141 = scalar_lea.hbm %s1, %s140
          %s143 = sshll.u32 %s136, 4
          %s144 = int_to_ptr.vmem [resolvable:$true] %s143
          %146 = dma.hbm_to_vmem [thread:$0]  %s141, 128, %s144, %s133
        $region24: #{tpu_custom_call.1} parent=15 // pred_fallthru
          _
      $region16: #{tpu_custom_call.1} parent=5 // pred_fallthru
        _
      %p147 = scmp.le.s32.totalorder 1, %s14
      %p148 = scmp.lt.s32.totalorder %s14, 3
      %p149 = pnand %p147, %p148
      %p150 = pneg %p149
      // Predicated region
      $region25: #{tpu_custom_call.1} parent=5 // pred_check
        _
      $region26: #{tpu_custom_call.1} parent=5 // pred_check_branch
        %152 = sbr.rel (%p149) target = $region28
      $region27: #{tpu_custom_call.1} parent=5 // pred_region
        %s153 = ssub.s32 %s14, 1
        %s154 = sand.u32 %s27, 1
        %s155 = scalar_lea.sflag [#allocation3], %s154
        %s156 = sand.u32 %s27, 1
        %s157 = smul.addr %s156, 8
        %s158 = scalar_lea.vmem [#allocation2], %s157
        // Predicated region
        $region29: #{tpu_custom_call.1} parent=27 // pred_check
          %p159 = pneg %p40
        $region30: #{tpu_custom_call.1} parent=27 // pred_check_branch
          %161 = sbr.rel (%p159) target = $region32
        $region31: #{tpu_custom_call.1} parent=27 // pred_region
          %162 = dma.done %s155, 128
        $region32: #{tpu_custom_call.1} parent=27 // pred_fallthru
          _
        %s163 = sand.u32 %s53, 1
        %s164 = scalar_lea.sflag [#allocation5], %s163
        %s165 = sand.u32 %s53, 1
        %s166 = smul.addr %s165, 8
        %s167 = scalar_lea.vmem [#allocation4], %s166
        // Predicated region
        $region33: #{tpu_custom_call.1} parent=27 // pred_check
          %p168 = pneg %p66
        $region34: #{tpu_custom_call.1} parent=27 // pred_check_branch
          %170 = sbr.rel (%p168) target = $region36
        $region35: #{tpu_custom_call.1} parent=27 // pred_region
          %171 = dma.done %s164, 128
        $region36: #{tpu_custom_call.1} parent=27 // pred_fallthru
          _
        %s172 = sand.u32 %s27, 1
        %s173 = scalar_lea.sflag [#allocation3], %s172
        %s174 = sand.u32 %s27, 1
        %s175 = smul.addr %s174, 8
        %s176 = scalar_lea.vmem [#allocation2], %s175
        %p177 = pneg %p40
        %p178 = pneg %p37
        %s179 = sand.u32 %s53, 1
        %s180 = scalar_lea.sflag [#allocation5], %s179
        %s181 = sand.u32 %s53, 1
        %s182 = smul.addr %s181, 8
        %s183 = scalar_lea.vmem [#allocation4], %s182
        %p184 = pneg %p66
        %p185 = pneg %p63
        %p186 = pneg %p92
        %p187 = pneg %p89
        %p188 = scmp.lt.s32.totalorder %s19, 1
        %s189 = scalar_select %p188, %s19, 1
        %s190 = smul.addr %s189, 8
        %s191 = scalar_lea.vmem %s2, %s190
        %p192 = scmp.lt.s32.totalorder %s19, 1
        %s193 = scalar_select %p192, %s19, 1
        %s194 = smul.addr %s193, 8
        %s195 = scalar_lea.vmem %s2, %s194
        %v196 = vld [vmem:[%s158] sm:$0xff]
        %v197 = vld [vmem:[%s167] sm:$0xff]
        %v198 = vmul.f32 %v196, %v197
        %vm199 = vcmask 261120
        %v200 = vsel %vm199, %v198, 0.0
        %201 = vadd.xlane.f32.xlu0 %v200
        %v202 = vpop.xlane.xlu0 %201
        %v203 = vmul.f32 %v196, %v196
        %v204 = vsel %vm199, %v203, 0.0
        %205 = vadd.xlane.f32.xlu0 %v204
        %v206 = vpop.xlane.xlu0 %205
        %v207 = vmul.f32 %v197, %v197
        %v208 = vsel %vm199, %v207, 0.0
        %209 = vadd.xlane.f32.xlu0 %v208
        %v210 = vpop.xlane.xlu0 %209
        %v211 = vrsqrt.pop %v206
        %v212 = vmul.f32 %v206, %v211
        %vm213 = vcmp.eq.f32.partialorder %v206, inf
        %v214 = vsel %vm213, %v206, %v212
        %vm215 = vcmp.eq.f32.partialorder %v206, 0.0
        %v216 = vand.u32 %v206, 2147483648
        %v217 = vsel %vm215, %v216, %v214
        %v218 = vrsqrt.pop %v210
        %v219 = vmul.f32 %v210, %v218
        %vm220 = vcmp.eq.f32.partialorder %v210, inf
        %v221 = vsel %vm220, %v210, %v219
        %vm222 = vcmp.eq.f32.partialorder %v210, 0.0
        %v223 = vand.u32 %v210, 2147483648
        %v224 = vsel %vm222, %v223, %v221
        %v225 = vmul.f32 %v217, %v224
        %v226 = vmax.f32 %v225, 1e-08
        %v227 = vrcp.pop %v226
        %v228 = vmul.f32 1.0, %v227
        %v229 = vmul.f32 %v202, %v228
        %v230 = vmul.f32 %v229, 20.0
        %vm231 = vcmask 7168
        %232 = vst.msk [vmem:[%s195] sm:$0xff] %vm231, %v230
        %p233 = scmp.lt.s32.totalorder %s19, 1
        %s234 = scalar_select %p233, %s19, 1
        %s235 = smul.addr %s234, 8
        %s236 = scalar_lea.vmem %s2, %s235
        // Predicated region
        $region37: #{tpu_custom_call.1} parent=27 // pred_check
          %p237 = pneg %p89
        $region38: #{tpu_custom_call.1} parent=27 // pred_check_branch
          %239 = sbr.rel (%p237) target = $region40
        $region39: #{tpu_custom_call.1} parent=27 // pred_region
          _
        $region40: #{tpu_custom_call.1} parent=27 // pred_fallthru
          _
      $region28: #{tpu_custom_call.1} parent=5 // pred_fallthru
        _
      %p240 = scmp.le.s32.totalorder 2, %s14
      // Predicated region
      $region41: #{tpu_custom_call.1} parent=5 // pred_check
        %p241 = pneg %p240
      $region42: #{tpu_custom_call.1} parent=5 // pred_check_branch
        %243 = sbr.rel (%p241) target = $region44
      $region43: #{tpu_custom_call.1} parent=5 // pred_region
        %s244 = ssub.s32 %s14, 2
        // Predicated region
        $region45: #{tpu_custom_call.1} parent=43 // pred_check
          %p245 = pneg %p95
        $region46: #{tpu_custom_call.1} parent=43 // pred_check_branch
          %247 = sbr.rel (%p245) target = $region48
        $region47: #{tpu_custom_call.1} parent=43 // pred_region
          %p248 = scmp.lt.s32.totalorder %s20, 1
          %s249 = scalar_select %p248, %s20, 1
          %s250 = smul.addr %s249, 8
          %s251 = scalar_lea.vmem %s2, %s250
        $region48: #{tpu_custom_call.1} parent=43 // pred_fallthru
          _
      $region44: #{tpu_custom_call.1} parent=5 // pred_fallthru
        _
    $region6: #{tpu_custom_call.1} parent=1 // loop_footer
      %s18 = sadd.s32 1, %s14
    $region7: #{tpu_custom_call.1} parent=1 // loop_footer_branch
      %13 = sbr.rel target = $region3
    $region8: #{tpu_custom_call.1} parent=1 // loop_exit
      _
    %252 = vsyncpa [#allocation3], 1
    %s253 = scalar_lea.sflag [#allocation3], 1
    %254 = vsyncpa %s253, 1
    %255 = vsyncpa [#allocation5], 1
    %s256 = scalar_lea.sflag [#allocation5], 1
    %257 = vsyncpa %s256, 1

</llo_original>
